<compile_context>
chip_gen: v7x
topology: tpu7x:2x2x1
jax: 0.10.0
libtpu: 0.0.40
codegen_flags: <defaults>
</compile_context>

<pallas_src>
import jax
import jax.numpy as jnp
from jax import lax
from jax.experimental import pallas as pl
from jax.experimental.pallas import tpu as pltpu

_HIDDEN = 200
_HIDDEN_PAD = 256  # MXU / vreg friendly


def _round_up(n, m):
    return ((n + m - 1) // m) * m


def value_fn_kernel(x_ref, w1_ref, b1_ref, w2_ref, b2_ref, w3_ref, b3_ref, o_ref):
    """Fused 3-layer MLP tile.

    x_ref  : (TB, state_dim)   bf16
    w1_ref : (state_dim, 256)  bf16    b1_ref : (1, 256) f32
    w2_ref : (256, 256)        bf16    b2_ref : (1, 256) f32
    w3_ref : (1, 256)          bf16    b3_ref : (1, 1)   f32
    o_ref  : (1, TB)           f32     lane-dense transposed output row
    """
    x = x_ref[...]

    # fc1 + leaky_relu(0.2): bf16 MXU inputs, f32 accumulate, f32 VPU epilogue.
    h1 = jnp.dot(x, w1_ref[...], preferred_element_type=jnp.float32) + b1_ref[...]
    h1 = jnp.where(h1 > 0, h1, 0.2 * h1)

    # fc2 + leaky_relu(0.2)
    h2 = jnp.dot(h1.astype(jnp.bfloat16), w2_ref[...],
                 preferred_element_type=jnp.float32) + b2_ref[...]
    h2 = jnp.where(h2 > 0, h2, 0.2 * h2)

    # out layer (256 -> 1): contract hidden dim of h2 against the (1, 256)
    # weight row -> (1, TB) lane-dense result (avoids an N=1 MXU matmul and
    # masked (TB, 1) column stores).
    r = lax.dot_general(
        w3_ref[...], h2.astype(jnp.bfloat16),
        dimension_numbers=(((1,), (1,)), ((), ())),
        preferred_element_type=jnp.float32)
    o_ref[...] = r + b3_ref[...]


def prepare_params(params):
    """One-time prep of torch-convention params into kernel layout.

    Hoisted out of the forward: weights stored as (in, out), hidden dims
    zero-padded 200 -> 256, matmul operands cast to bf16 (f32 accumulation is
    done in-kernel), biases kept f32.
    """
    pad = _HIDDEN_PAD - _HIDDEN
    w1 = jnp.pad(params["fc1_w"].T, ((0, 0), (0, pad))).astype(jnp.bfloat16)
    b1 = jnp.pad(params["fc1_b"], (0, pad)).astype(jnp.float32)[None, :]
    w2 = jnp.pad(params["fc2_w"].T, ((0, pad), (0, pad))).astype(jnp.bfloat16)
    b2 = jnp.pad(params["fc2_b"], (0, pad)).astype(jnp.float32)[None, :]
    w3 = jnp.pad(params["out_w"], ((0, 0), (0, pad))).astype(jnp.bfloat16)  # (1, 256)
    b3 = params["out_b"].astype(jnp.float32).reshape(1, 1)
    return dict(w1=w1, b1=b1, w2=w2, b2=b2, w3=w3, b3=b3)


def value_function_forward(x, kp):
    """x: (B, state_dim) f32.  kp: output of prepare_params."""
    B, state_dim = x.shape

    # Batch tile: large enough to amortize the ~0.35us/grid-step overhead and
    # keep the MXU fed; small enough that double-buffered x/out tiles plus the
    # ~170 KiB of resident weights stay far below the smallest (v7x/v5e)
    # scoped-VMEM budgets.
    if B > 512:
        tb = 512
    else:
        tb = _round_up(B, 16)            # bf16 sublane packing -> multiple of 16
    padded_b = _round_up(B, tb)
    num_tiles = padded_b // tb

    xb = x.astype(jnp.bfloat16)
    if padded_b != B:
        xb = jnp.pad(xb, ((0, padded_b - B), (0, 0)))

    def resident(a):                     # weights/biases: DMA'd once, stay in VMEM
        return pl.BlockSpec(a.shape, lambda i: (0,) * a.ndim)

    out_row = pl.pallas_call(
        value_fn_kernel,
        out_shape=jax.ShapeDtypeStruct((1, padded_b), jnp.float32),
        grid_spec=pl.GridSpec(
            grid=(num_tiles,),
            in_specs=[
                pl.BlockSpec((tb, state_dim), lambda i: (i, 0)),
                resident(kp["w1"]), resident(kp["b1"]),
                resident(kp["w2"]), resident(kp["b2"]),
                resident(kp["w3"]), resident(kp["b3"]),
            ],
            out_specs=pl.BlockSpec((1, tb), lambda i: (0, i)),
        ),
        compiler_params=pltpu.CompilerParams(
            dimension_semantics=("parallel",)),
    )(xb, kp["w1"], kp["b1"], kp["w2"], kp["b2"], kp["w3"], kp["b3"])

    return out_row[0, :B].reshape(B, 1)


def init_params(key, state_dim):
    """Deterministic init mimicking nn.Linear (uniform +-1/sqrt(fan_in))."""
    ks = jax.random.split(key, 6)

    def lin(kw, kb, fan_in, fan_out):
        bound = 1.0 / jnp.sqrt(jnp.float32(fan_in))
        w = jax.random.uniform(kw, (fan_out, fan_in), jnp.float32, -bound, bound)
        b = jax.random.uniform(kb, (fan_out,), jnp.float32, -bound, bound)
        return w, b

    fc1_w, fc1_b = lin(ks[0], ks[1], state_dim, 200)
    fc2_w, fc2_b = lin(ks[2], ks[3], 200, 200)
    out_w, out_b = lin(ks[4], ks[5], 200, 1)
    return dict(fc1_w=fc1_w, fc1_b=fc1_b,
                fc2_w=fc2_w, fc2_b=fc2_b,
                out_w=out_w, out_b=out_b)


def reference_forward(x, p):
    """Pure-JAX f32 reference matching the PyTorch forward exactly."""
    def lrelu(v):
        return jnp.where(v > 0, v, 0.2 * v)
    h = lrelu(x @ p["fc1_w"].T + p["fc1_b"])
    h = lrelu(h @ p["fc2_w"].T + p["fc2_b"])
    return h @ p["out_w"].T + p["out_b"]


if __name__ == "__main__":
    key = jax.random.PRNGKey(0)
    k_param, k_x = jax.random.split(key)

    batch, state_dim = 8, 16
    params = init_params(k_param, state_dim)
    kparams = prepare_params(params)
    x = jax.random.normal(k_x, (batch, state_dim), jnp.float32)

    out = value_function_forward(x, kparams)
    out = jax.block_until_ready(out)

    ref = reference_forward(x, params)
    assert out.shape == (batch, 1), out.shape
    # bf16 MXU operands (f32 accumulation) -> widened tolerance vs f32 reference.
    assert jnp.allclose(out, ref, atol=5e-2, rtol=5e-2), (out, ref)

    print("KERNEL_OK")
</pallas_src>

<mosaic_0001>
module attributes {stable_mosaic.version = 11 : i64} {
  func.func @value_fn_kernel(%arg0: i32, %arg1: memref<16x16xbf16, #tpu.memory_space<vmem>>, %arg2: memref<16x256xbf16, #tpu.memory_space<vmem>>, %arg3: memref<1x256xf32, #tpu.memory_space<vmem>>, %arg4: memref<256x256xbf16, #tpu.memory_space<vmem>>, %arg5: memref<1x256xf32, #tpu.memory_space<vmem>>, %arg6: memref<1x256xbf16, #tpu.memory_space<vmem>>, %arg7: memref<1x1xf32, #tpu.memory_space<vmem>>, %arg8: memref<1x16xf32, #tpu.memory_space<vmem>>) attributes {dimension_semantics = [#tpu.dimension_semantics<parallel>], iteration_bounds = array<i64: 1>, scalar_prefetch = 0 : i64, scratch_operands = 0 : i64, tpu.core_type = #tpu.core_type<tc>, window_params = [{transform_indices = @transform_0, window_bounds = array<i64: 16, 16>}, {pipeline_mode = #tpu.pipeline_mode<synchronous>, transform_indices = @transform_1, window_bounds = array<i64: 16, 256>}, {pipeline_mode = #tpu.pipeline_mode<synchronous>, transform_indices = @transform_2, window_bounds = array<i64: 1, 256>}, {pipeline_mode = #tpu.pipeline_mode<synchronous>, transform_indices = @transform_3, window_bounds = array<i64: 256, 256>}, {pipeline_mode = #tpu.pipeline_mode<synchronous>, transform_indices = @transform_4, window_bounds = array<i64: 1, 256>}, {pipeline_mode = #tpu.pipeline_mode<synchronous>, transform_indices = @transform_5, window_bounds = array<i64: 1, 256>}, {pipeline_mode = #tpu.pipeline_mode<synchronous>, transform_indices = @transform_6, window_bounds = array<i64: 1, 1>}, {transform_indices = @transform_7, window_bounds = array<i64: 1, 16>}]} {
    %c0 = arith.constant 0 : index
    %c0_0 = arith.constant 0 : index
    %0 = vector.load %arg1[%c0, %c0_0] : memref<16x16xbf16, #tpu.memory_space<vmem>>, vector<16x16xbf16>
    %c0_1 = arith.constant 0 : index
    %c0_2 = arith.constant 0 : index
    %1 = vector.load %arg2[%c0_1, %c0_2] : memref<16x256xbf16, #tpu.memory_space<vmem>>, vector<16x256xbf16>
    %cst = arith.constant dense<0.000000e+00> : vector<16x256xf32>
    %2 = tpu.matmul %0, %1, %cst {dimension_numbers = #tpu.dot_dimension_numbers<[1], [0], [0], [1], [0, 0, 1, 1], [], []>} : vector<16x16xbf16>, vector<16x256xbf16>, vector<16x256xf32> -> vector<16x256xf32>
    %c0_3 = arith.constant 0 : index
    %c0_4 = arith.constant 0 : index
    %3 = vector.load %arg3[%c0_3, %c0_4] : memref<1x256xf32, #tpu.memory_space<vmem>>, vector<1x256xf32>
    %4 = vector.broadcast %3 : vector<1x256xf32> to vector<16x256xf32>
    %5 = arith.addf %2, %4 : vector<16x256xf32>
    %cst_5 = arith.constant 0.000000e+00 : f32
    %6 = vector.broadcast %cst_5 : f32 to vector<16x256xf32>
    %7 = arith.cmpf ogt, %5, %6 : vector<16x256xf32>
    %cst_6 = arith.constant 2.000000e-01 : f32
    %8 = vector.broadcast %cst_6 : f32 to vector<16x256xf32>
    %9 = arith.mulf %8, %5 : vector<16x256xf32>
    %10 = arith.select %7, %5, %9 : vector<16x256xi1>, vector<16x256xf32>
    %11 = arith.truncf %10 : vector<16x256xf32> to vector<16x256xbf16>
    %c0_7 = arith.constant 0 : index
    %c0_8 = arith.constant 0 : index
    %12 = vector.load %arg4[%c0_7, %c0_8] : memref<256x256xbf16, #tpu.memory_space<vmem>>, vector<256x256xbf16>
    %cst_9 = arith.constant dense<0.000000e+00> : vector<16x256xf32>
    %13 = tpu.matmul %11, %12, %cst_9 {dimension_numbers = #tpu.dot_dimension_numbers<[1], [0], [0], [1], [0, 0, 1, 1], [], []>} : vector<16x256xbf16>, vector<256x256xbf16>, vector<16x256xf32> -> vector<16x256xf32>
    %c0_10 = arith.constant 0 : index
    %c0_11 = arith.constant 0 : index
    %14 = vector.load %arg5[%c0_10, %c0_11] : memref<1x256xf32, #tpu.memory_space<vmem>>, vector<1x256xf32>
    %15 = vector.broadcast %14 : vector<1x256xf32> to vector<16x256xf32>
    %16 = arith.addf %13, %15 : vector<16x256xf32>
    %cst_12 = arith.constant 0.000000e+00 : f32
    %17 = vector.broadcast %cst_12 : f32 to vector<16x256xf32>
    %18 = arith.cmpf ogt, %16, %17 : vector<16x256xf32>
    %cst_13 = arith.constant 2.000000e-01 : f32
    %19 = vector.broadcast %cst_13 : f32 to vector<16x256xf32>
    %20 = arith.mulf %19, %16 : vector<16x256xf32>
    %21 = arith.select %18, %16, %20 : vector<16x256xi1>, vector<16x256xf32>
    %c0_14 = arith.constant 0 : index
    %c0_15 = arith.constant 0 : index
    %22 = vector.load %arg6[%c0_14, %c0_15] : memref<1x256xbf16, #tpu.memory_space<vmem>>, vector<1x256xbf16>
    %23 = arith.truncf %21 : vector<16x256xf32> to vector<16x256xbf16>
    %cst_16 = arith.constant dense<0.000000e+00> : vector<1x16xf32>
    %24 = tpu.matmul %22, %23, %cst_16 {dimension_numbers = #tpu.dot_dimension_numbers<[1], [1], [0], [0], [0, 0, 1, 0], [], []>} : vector<1x256xbf16>, vector<16x256xbf16>, vector<1x16xf32> -> vector<1x16xf32>
    %c0_17 = arith.constant 0 : index
    %c0_18 = arith.constant 0 : index
    %25 = vector.load %arg7[%c0_17, %c0_18] : memref<1x1xf32, #tpu.memory_space<vmem>>, vector<1x1xf32>
    %26 = vector.broadcast %25 : vector<1x1xf32> to vector<1x16xf32>
    %27 = arith.addf %24, %26 : vector<1x16xf32>
    %c0_19 = arith.constant 0 : index
    %c0_20 = arith.constant 0 : index
    %28 = vector.load %arg8[%c0_19, %c0_20] : memref<1x16xf32, #tpu.memory_space<vmem>>, vector<1x16xf32>
    tpu.vector_store %arg8[%c0_19, %c0_20], %27 {strides = array<i32>} : memref<1x16xf32, #tpu.memory_space<vmem>>, vector<1x16xf32>,
    return
  }
  func.func @transform_0(%arg0: i32) -> (i32, i32) {
    %c0_i32 = arith.constant 0 : i32
    %c0_i32_0 = arith.constant 0 : i32
    return %arg0, %c0_i32 : i32, i32
  }
  func.func @transform_1(%arg0: i32) -> (i32, i32) {
    %c0_i32 = arith.constant 0 : i32
    %c0_i32_0 = arith.constant 0 : i32
    %c0_i32_1 = arith.constant 0 : i32
    return %c0_i32, %c0_i32_0 : i32, i32
  }
  func.func @transform_2(%arg0: i32) -> (i32, i32) {
    %c0_i32 = arith.constant 0 : i32
    %c0_i32_0 = arith.constant 0 : i32
    %c0_i32_1 = arith.constant 0 : i32
    return %c0_i32, %c0_i32_0 : i32, i32
  }
  func.func @transform_3(%arg0: i32) -> (i32, i32) {
    %c0_i32 = arith.constant 0 : i32
    %c0_i32_0 = arith.constant 0 : i32
    %c0_i32_1 = arith.constant 0 : i32
    return %c0_i32, %c0_i32_0 : i32, i32
  }
  func.func @transform_4(%arg0: i32) -> (i32, i32) {
    %c0_i32 = arith.constant 0 : i32
    %c0_i32_0 = arith.constant 0 : i32
    %c0_i32_1 = arith.constant 0 : i32
    return %c0_i32, %c0_i32_0 : i32, i32
  }
  func.func @transform_5(%arg0: i32) -> (i32, i32) {
    %c0_i32 = arith.constant 0 : i32
    %c0_i32_0 = arith.constant 0 : i32
    %c0_i32_1 = arith.constant 0 : i32
    return %c0_i32, %c0_i32_0 : i32, i32
  }
  func.func @transform_6(%arg0: i32) -> (i32, i32) {
    %c0_i32 = arith.constant 0 : i32
    %c0_i32_0 = arith.constant 0 : i32
    %c0_i32_1 = arith.constant 0 : i32
    return %c0_i32, %c0_i32_0 : i32, i32
  }
  func.func @transform_7(%arg0: i32) -> (i32, i32) {
    %c0_i32 = arith.constant 0 : i32
    %c0_i32_0 = arith.constant 0 : i32
    return %c0_i32, %arg0 : i32, i32
  }
}

</mosaic_0001>

<llo_original>
// kernel: tpu_custom_call.1
$region0: #{tpu_custom_call.1}
  #allocation0 [shape = 'u32[]', space=smem, size = 0x4, offset = 0x4, fixed_abs, tag = 'smem constant byte address 0x4 - core index']
  #allocation1 [shape = 'u32[144,128]{1,0:T(1,128)}', space=vmem, size = 0x12000, scoped, tag = 'internal scratch']
  #allocation2 [shape = 'f32[1,1]{1,0:T(1,128)S(1)}', space=vmem, size = 0x200, scoped, tag = 'scoped memory for tpu_custom_call.1']
  %s0 = inlined_call_operand.hbm [shape: bf16[16,16], index: 0, kind: input, shape index: {}]
  %s1 = inlined_call_operand.hbm [shape: bf16[16,256], index: 1, kind: input, shape index: {}]
  %s2 = inlined_call_operand.vmem [shape: f32[1,256], index: 2, kind: input, shape index: {}]
  %s3 = inlined_call_operand.hbm [shape: bf16[256,256], index: 3, kind: input, shape index: {}]
  %s4 = inlined_call_operand.vmem [shape: f32[1,256], index: 4, kind: input, shape index: {}]
  %s5 = inlined_call_operand.vmem [shape: bf16[1,256], index: 5, kind: input, shape index: {}]
  %s6 = inlined_call_operand.<no memory space> [shape: f32[1,1], index: 6, kind: input, shape index: {}]
  %s7 = inlined_call_operand.hbm [shape: f32[1,16], index: 7, kind: output, shape index: {}]
  %s8 = sld [smem:[#allocation0]]
  $region50: #{tpu_custom_call.1} parent=0
    _
  %s10 = ssub.s32 1, %s8
  %s11 = scalar_select 0, %s10, %s8
  %v12 = vstv %s6
  %13 = vst [vmem:[#allocation2] sm:$0x1] %v12
  $region1: #{tpu_custom_call.1} parent=0
    #allocation3 [shape = 'u8[4096]{0}', space=vmem, size = 0x1000, scoped, tag = 'input window, operand 0, single buffered']
    #allocation4 [shape = 's32[1]{0}', space=sflag, size = 0x4, scoped, tag = 'scoped memory for tpu_custom_call.1']
    #allocation5 [shape = 's32[1]{0}', space=sflag, size = 0x4, scoped, tag = 'scoped memory for tpu_custom_call.1']
    #allocation6 [shape = 'u8[8192]{0}', space=vmem, size = 0x2000, scoped, tag = 'input window, operand 1, single buffered']
    #allocation7 [shape = 's32[1]{0}', space=sflag, size = 0x4, scoped, tag = 'scoped memory for tpu_custom_call.1']
    #allocation8 [shape = 'u8[131072]{0}', space=vmem, size = 0x20000, scoped, tag = 'input window, operand 3, single buffered']
    #allocation9 [shape = 'u8[512]{0}', space=vmem, size = 0x400, scoped, tag = 'output window, operand 0, single buffered']
    %14 = vsyncpa [#allocation4], 0
    %15 = vsyncpa [#allocation7], 0
    %16 = vsyncpa [#allocation5], 0
    // Predicated region
    $region2: #{tpu_custom_call.1} parent=1 // pred_check
      _
    $region3: #{tpu_custom_call.1} parent=1 // pred_check_branch
      %18 = sbr.rel (0) target = $region5
    $region4: #{tpu_custom_call.1} parent=1 // pred_region
      %s20 = ssub.s32 128, 128
      %21 = vsyncadd [#allocation4], %s20
      %s22 = sshll.u32 [#allocation3], 4
      %s23 = int_to_ptr.vmem [resolvable:$true] %s22
      %28 = dma.hbm_to_vmem [thread:$0]  %s0, 128, %s23, [#allocation4], 64, 64, 4
    $region5: #{tpu_custom_call.1} parent=1 // pred_fallthru
      _
    // Predicated region
    $region6: #{tpu_custom_call.1} parent=1 // pred_check
      _
    $region7: #{tpu_custom_call.1} parent=1 // pred_check_branch
      %30 = sbr.rel (0) target = $region9
    $region8: #{tpu_custom_call.1} parent=1 // pred_region
      %s32 = ssub.s32 256, 256
      %33 = vsyncadd [#allocation7], %s32
      %s34 = sshll.u32 [#allocation6], 4
      %s35 = int_to_ptr.vmem [resolvable:$true] %s34
      %40 = dma.hbm_to_vmem [thread:$0]  %s1, 256, %s35, [#allocation7], 128, 128, 8
    $region9: #{tpu_custom_call.1} parent=1 // pred_fallthru
      _
    // Predicated region
    $region10: #{tpu_custom_call.1} parent=1 // pred_check
      _
    $region11: #{tpu_custom_call.1} parent=1 // pred_check_branch
      %42 = sbr.rel (0) target = $region13
    $region12: #{tpu_custom_call.1} parent=1 // pred_region
      _
    $region13: #{tpu_custom_call.1} parent=1 // pred_fallthru
      _
    // Predicated region
    $region14: #{tpu_custom_call.1} parent=1 // pred_check
      _
    $region15: #{tpu_custom_call.1} parent=1 // pred_check_branch
      %44 = sbr.rel (0) target = $region17
    $region16: #{tpu_custom_call.1} parent=1 // pred_region
      %s46 = ssub.s32 4096, 4096
      %47 = vsyncadd [#allocation7], %s46
      %s48 = sshll.u32 [#allocation8], 4
      %s49 = int_to_ptr.vmem [resolvable:$true] %s48
      %54 = dma.hbm_to_vmem [thread:$0]  %s3, 4096, %s49, [#allocation7], 128, 128, 8
    $region17: #{tpu_custom_call.1} parent=1 // pred_fallthru
      _
    // Predicated region
    $region18: #{tpu_custom_call.1} parent=1 // pred_check
      _
    $region19: #{tpu_custom_call.1} parent=1 // pred_check_branch
      %56 = sbr.rel (0) target = $region21
    $region20: #{tpu_custom_call.1} parent=1 // pred_region
      _
    $region21: #{tpu_custom_call.1} parent=1 // pred_fallthru
      _
    // Predicated region
    $region22: #{tpu_custom_call.1} parent=1 // pred_check
      _
    $region23: #{tpu_custom_call.1} parent=1 // pred_check_branch
      %58 = sbr.rel (0) target = $region25
    $region24: #{tpu_custom_call.1} parent=1 // pred_region
      _
    $region25: #{tpu_custom_call.1} parent=1 // pred_fallthru
      _
    // Predicated region
    $region26: #{tpu_custom_call.1} parent=1 // pred_check
      _
    $region27: #{tpu_custom_call.1} parent=1 // pred_check_branch
      %60 = sbr.rel (0) target = $region29
    $region28: #{tpu_custom_call.1} parent=1 // pred_region
      _
    $region29: #{tpu_custom_call.1} parent=1 // pred_fallthru
      _
    // Predicated region
    $region30: #{tpu_custom_call.1} parent=1 // pred_check
      _
    $region31: #{tpu_custom_call.1} parent=1 // pred_check_branch
      %62 = sbr.rel (0) target = $region33
    $region32: #{tpu_custom_call.1} parent=1 // pred_region
      %63 = dma.done [#allocation4], 128
    $region33: #{tpu_custom_call.1} parent=1 // pred_fallthru
      _
    // Predicated region
    $region34: #{tpu_custom_call.1} parent=1 // pred_check
      _
    $region35: #{tpu_custom_call.1} parent=1 // pred_check_branch
      %65 = sbr.rel (0) target = $region37
    $region36: #{tpu_custom_call.1} parent=1 // pred_region
      %66 = dma.done [#allocation7], 256
    $region37: #{tpu_custom_call.1} parent=1 // pred_fallthru
      _
    // Predicated region
    $region38: #{tpu_custom_call.1} parent=1 // pred_check
      _
    $region39: #{tpu_custom_call.1} parent=1 // pred_check_branch
      %68 = sbr.rel (0) target = $region41
    $region40: #{tpu_custom_call.1} parent=1 // pred_region
      %69 = dma.done [#allocation7], 4096
    $region41: #{tpu_custom_call.1} parent=1 // pred_fallthru
      _
    %v71 = vld [vmem:[#allocation3] sm:$0xf]
    %v72 = vld [vmem:[#allocation3 + $0x4] sm:$0xf]
    %v73 = vld [vmem:[#allocation6] sm:$0xff]
    %v74 = vld [vmem:[#allocation6 + $0x8] sm:$0xff]
    %v75 = vld [vmem:[%s2] sm:$0x3]
    %v77 = vlaneseq
    %v78 = vshrl.u32 %v77, 7
    %v79 = vsub.s32 0, %v78
    %v80 = vrot.slane %v75, %v79
    %v81 = vlaneseq
    %v82 = vshrl.u32 %v81, 7
    %v83 = vsub.s32 1, %v82
    %v84 = vrot.slane %v75, %v83
    %v89 = vunpack.c.l.b16 %v71
    %v90 = vunpack.c.l.b16 %v72
    %v91 = vpack.c.b16 %v90, %v89
    %v94 = vunpack.c.l.b16 %v73
    %v95 = vunpack.c.h.b16 %v73
    %v96 = vunpack.c.l.b16 %v74
    %v97 = vunpack.c.h.b16 %v74
    %v98 = vpack.c.b16 %v96, %v94
    %v99 = vpack.c.b16 %v97, %v95
    %vm102 = vcmask 130048
    %v104 = vsel %vm102, %v91, 0
    %106 = vmatprep.subr.bf16.mxu0 %v99
    %107 = vmatpush1.bf16.msra.mxu0 %v98
    %108 = vmatprep.subr.bf16.mxu0 0
    %109 = vmatpush1.bf16.msra.mxu0 0
    %110 = vmatprep.subr.bf16.mxu0 0
    %111 = vmatpush1.bf16.msra.mxu0 0
    %112 = vmatprep.subr.bf16.mxu0 0
    %113 = vmatpush1.bf16.msra.mxu0 0
    %114 = vmatprep.subr.bf16.mxu0 0
    %115 = vmatpush1.bf16.msra.mxu0 0
    %116 = vmatprep.subr.bf16.mxu0 0
    %117 = vmatpush1.bf16.msra.mxu0 0
    %118 = vmatprep.subr.bf16.mxu0 0
    %119 = vmatpush1.bf16.msra.mxu0 0
    %120 = vmatprep.subr.bf16.mxu0 0
    %121 = vmatpush1.bf16.msra.mxu0 0
    %122 = vmatprep.subr.bf16.mxu0 0
    %123 = vmatpush1.bf16.msra.mxu0 0
    %124 = vmatprep.subr.bf16.mxu0 0
    %125 = vmatpush1.bf16.msra.mxu0 0
    %126 = vmatprep.subr.bf16.mxu0 0
    %127 = vmatpush1.bf16.msra.mxu0 0
    %128 = vmatprep.subr.bf16.mxu0 0
    %129 = vmatpush1.bf16.msra.mxu0 0
    %130 = vmatprep.subr.bf16.mxu0 0
    %131 = vmatpush1.bf16.msra.mxu0 0
    %132 = vmatprep.subr.bf16.mxu0 0
    %133 = vmatpush1.bf16.msra.mxu0 0
    %134 = vmatprep.subr.bf16.mxu0 0
    %135 = vmatpush1.bf16.msra.mxu0 0
    %136 = vmatprep.subr.bf16.mxu0 0
    %137 = vmatpush1.bf16.msra.mxu0 0
    %138 = vmatprep.mubr.bf16.mxu0 0
    %139 = vmatmul.mubr.bf16.gmra.mrb[0].mxu0 %v104
    %v140 = vpop.f32.mrb[0].mxu0
    %v141 = vadd.f32 %v80, %v140
    %v142 = vpop.f32.mrb[0].mxu0
    %v143 = vadd.f32 %v84, %v142
    %v144 = vpop.f32.mrb[0].mxu0
    %v145 = vadd.f32 %v80, %v144
    %v146 = vpop.f32.mrb[0].mxu0
    %v147 = vadd.f32 %v84, %v146
    %148 = vdwg.mxu0
    %vm149 = vcmp.gt.f32.partialorder %v141, 0.0
    %vm150 = vcmp.gt.f32.partialorder %v143, 0.0
    %vm151 = vcmp.gt.f32.partialorder %v145, 0.0
    %vm152 = vcmp.gt.f32.partialorder %v147, 0.0
    %v153 = vmul.f32 %v141, 0.2
    %v154 = vmul.f32 %v143, 0.2
    %v155 = vmul.f32 %v145, 0.2
    %v156 = vmul.f32 %v147, 0.2
    %v157 = vsel %vm149, %v141, %v153
    %v158 = vsel %vm150, %v143, %v154
    %v159 = vsel %vm151, %v145, %v155
    %v160 = vsel %vm152, %v147, %v156
    %v161 = vpack.c.bf16 %v159, %v157
    %v162 = vpack.c.bf16 %v160, %v158
    %v163 = vld [vmem:[#allocation8] sm:$0xff]
    %v164 = vld [vmem:[#allocation8 + $0x8] sm:$0xff]
    %v165 = vld [vmem:[#allocation8 + $0x10] sm:$0xff]
    %v166 = vld [vmem:[#allocation8 + $0x18] sm:$0xff]
    %v167 = vld [vmem:[#allocation8 + $0x20] sm:$0xff]
    %v168 = vld [vmem:[#allocation8 + $0x28] sm:$0xff]
    %v169 = vld [vmem:[#allocation8 + $0x30] sm:$0xff]
    %v170 = vld [vmem:[#allocation8 + $0x38] sm:$0xff]
    %v171 = vld [vmem:[#allocation8 + $0x40] sm:$0xff]
    %v172 = vld [vmem:[#allocation8 + $0x48] sm:$0xff]
    %v173 = vld [vmem:[#allocation8 + $0x50] sm:$0xff]
    %v174 = vld [vmem:[#allocation8 + $0x58] sm:$0xff]
    %v175 = vld [vmem:[#allocation8 + $0x60] sm:$0xff]
    %v176 = vld [vmem:[#allocation8 + $0x68] sm:$0xff]
    %v177 = vld [vmem:[#allocation8 + $0x70] sm:$0xff]
    %v178 = vld [vmem:[#allocation8 + $0x78] sm:$0xff]
    %v179 = vld [vmem:[#allocation8 + $0x80] sm:$0xff]
    %v180 = vld [vmem:[#allocation8 + $0x88] sm:$0xff]
    %v181 = vld [vmem:[#allocation8 + $0x90] sm:$0xff]
    %v182 = vld [vmem:[#allocation8 + $0x98] sm:$0xff]
    %v183 = vld [vmem:[#allocation8 + $0xa0] sm:$0xff]
    %v184 = vld [vmem:[#allocation8 + $0xa8] sm:$0xff]
    %v185 = vld [vmem:[#allocation8 + $0xb0] sm:$0xff]
    %v186 = vld [vmem:[#allocation8 + $0xb8] sm:$0xff]
    %v187 = vld [vmem:[#allocation8 + $0xc0] sm:$0xff]
    %v188 = vld [vmem:[#allocation8 + $0xc8] sm:$0xff]
    %v189 = vld [vmem:[#allocation8 + $0xd0] sm:$0xff]
    %v190 = vld [vmem:[#allocation8 + $0xd8] sm:$0xff]
    %v191 = vld [vmem:[#allocation8 + $0xe0] sm:$0xff]
    %v192 = vld [vmem:[#allocation8 + $0xe8] sm:$0xff]
    %v193 = vld [vmem:[#allocation8 + $0xf0] sm:$0xff]
    %v194 = vld [vmem:[#allocation8 + $0xf8] sm:$0xff]
    %v195 = vld [vmem:[%s4] sm:$0x3]
    %v197 = vlaneseq
    %v198 = vshrl.u32 %v197, 7
    %v199 = vsub.s32 0, %v198
    %v200 = vrot.slane %v195, %v199
    %v201 = vlaneseq
    %v202 = vshrl.u32 %v201, 7
    %v203 = vsub.s32 1, %v202
    %v204 = vrot.slane %v195, %v203
    %v239 = vunpack.c.l.b16 %v163
    %v240 = vunpack.c.h.b16 %v163
    %v241 = vunpack.c.l.b16 %v164
    %v242 = vunpack.c.h.b16 %v164
    %v243 = vunpack.c.l.b16 %v165
    %v244 = vunpack.c.h.b16 %v165
    %v245 = vunpack.c.l.b16 %v166
    %v246 = vunpack.c.h.b16 %v166
    %v247 = vunpack.c.l.b16 %v167
    %v248 = vunpack.c.h.b16 %v167
    %v249 = vunpack.c.l.b16 %v168
    %v250 = vunpack.c.h.b16 %v168
    %v251 = vunpack.c.l.b16 %v169
    %v252 = vunpack.c.h.b16 %v169
    %v253 = vunpack.c.l.b16 %v170
    %v254 = vunpack.c.h.b16 %v170
    %v255 = vunpack.c.l.b16 %v171
    %v256 = vunpack.c.h.b16 %v171
    %v257 = vunpack.c.l.b16 %v172
    %v258 = vunpack.c.h.b16 %v172
    %v259 = vunpack.c.l.b16 %v173
    %v260 = vunpack.c.h.b16 %v173
    %v261 = vunpack.c.l.b16 %v174
    %v262 = vunpack.c.h.b16 %v174
    %v263 = vunpack.c.l.b16 %v175
    %v264 = vunpack.c.h.b16 %v175
    %v265 = vunpack.c.l.b16 %v176
    %v266 = vunpack.c.h.b16 %v176
    %v267 = vunpack.c.l.b16 %v177
    %v268 = vunpack.c.h.b16 %v177
    %v269 = vunpack.c.l.b16 %v178
    %v270 = vunpack.c.h.b16 %v178
    %v271 = vunpack.c.l.b16 %v179
    %v272 = vunpack.c.h.b16 %v179
    %v273 = vunpack.c.l.b16 %v180
    %v274 = vunpack.c.h.b16 %v180
    %v275 = vunpack.c.l.b16 %v181
    %v276 = vunpack.c.h.b16 %v181
    %v277 = vunpack.c.l.b16 %v182
    %v278 = vunpack.c.h.b16 %v182
    %v279 = vunpack.c.l.b16 %v183
    %v280 = vunpack.c.h.b16 %v183
    %v281 = vunpack.c.l.b16 %v184
    %v282 = vunpack.c.h.b16 %v184
    %v283 = vunpack.c.l.b16 %v185
    %v284 = vunpack.c.h.b16 %v185
    %v285 = vunpack.c.l.b16 %v186
    %v286 = vunpack.c.h.b16 %v186
    %v287 = vunpack.c.l.b16 %v187
    %v288 = vunpack.c.h.b16 %v187
    %v289 = vunpack.c.l.b16 %v188
    %v290 = vunpack.c.h.b16 %v188
    %v291 = vunpack.c.l.b16 %v189
    %v292 = vunpack.c.h.b16 %v189
    %v293 = vunpack.c.l.b16 %v190
    %v294 = vunpack.c.h.b16 %v190
    %v295 = vunpack.c.l.b16 %v191
    %v296 = vunpack.c.h.b16 %v191
    %v297 = vunpack.c.l.b16 %v192
    %v298 = vunpack.c.h.b16 %v192
    %v299 = vunpack.c.l.b16 %v193
    %v300 = vunpack.c.h.b16 %v193
    %v301 = vunpack.c.l.b16 %v194
    %v302 = vunpack.c.h.b16 %v194
    %v303 = vpack.c.b16 %v241, %v239
    %v304 = vpack.c.b16 %v242, %v240
    %v305 = vpack.c.b16 %v245, %v243
    %v306 = vpack.c.b16 %v246, %v244
    %v307 = vpack.c.b16 %v249, %v247
    %v308 = vpack.c.b16 %v250, %v248
    %v309 = vpack.c.b16 %v253, %v251
    %v310 = vpack.c.b16 %v254, %v252
    %v311 = vpack.c.b16 %v257, %v255
    %v312 = vpack.c.b16 %v258, %v256
    %v313 = vpack.c.b16 %v261, %v259
    %v314 = vpack.c.b16 %v262, %v260
    %v315 = vpack.c.b16 %v265, %v263
    %v316 = vpack.c.b16 %v266, %v264
    %v317 = vpack.c.b16 %v269, %v267
    %v318 = vpack.c.b16 %v270, %v268
    %v319 = vpack.c.b16 %v273, %v271
    %v320 = vpack.c.b16 %v274, %v272
    %v321 = vpack.c.b16 %v277, %v275
    %v322 = vpack.c.b16 %v278, %v276
    %v323 = vpack.c.b16 %v281, %v279
    %v324 = vpack.c.b16 %v282, %v280
    %v325 = vpack.c.b16 %v285, %v283
    %v326 = vpack.c.b16 %v286, %v284
    %v327 = vpack.c.b16 %v289, %v287
    %v328 = vpack.c.b16 %v290, %v288
    %v329 = vpack.c.b16 %v293, %v291
    %v330 = vpack.c.b16 %v294, %v292
    %v331 = vpack.c.b16 %v297, %v295
    %v332 = vpack.c.b16 %v298, %v296
    %v333 = vpack.c.b16 %v301, %v299
    %v334 = vpack.c.b16 %v302, %v300
    %367 = vmatprep.subr.bf16.mxu0 %v304
    %368 = vmatpush1.bf16.msra.mxu0 %v303
    %369 = vmatprep.subr.bf16.mxu0 %v306
    %370 = vmatpush1.bf16.msra.mxu0 %v305
    %371 = vmatprep.subr.bf16.mxu0 %v308
    %372 = vmatpush1.bf16.msra.mxu0 %v307
    %373 = vmatprep.subr.bf16.mxu0 %v310
    %374 = vmatpush1.bf16.msra.mxu0 %v309
    %375 = vmatprep.subr.bf16.mxu0 %v312
    %376 = vmatpush1.bf16.msra.mxu0 %v311
    %377 = vmatprep.subr.bf16.mxu0 %v314
    %378 = vmatpush1.bf16.msra.mxu0 %v313
    %379 = vmatprep.subr.bf16.mxu0 %v316
    %380 = vmatpush1.bf16.msra.mxu0 %v315
    %381 = vmatprep.subr.bf16.mxu0 %v318
    %382 = vmatpush1.bf16.msra.mxu0 %v317
    %383 = vmatprep.subr.bf16.mxu0 %v320
    %384 = vmatpush1.bf16.msra.mxu0 %v319
    %385 = vmatprep.subr.bf16.mxu0 %v322
    %386 = vmatpush1.bf16.msra.mxu0 %v321
    %387 = vmatprep.subr.bf16.mxu0 %v324
    %388 = vmatpush1.bf16.msra.mxu0 %v323
    %389 = vmatprep.subr.bf16.mxu0 %v326
    %390 = vmatpush1.bf16.msra.mxu0 %v325
    %391 = vmatprep.subr.bf16.mxu0 %v328
    %392 = vmatpush1.bf16.msra.mxu0 %v327
    %393 = vmatprep.subr.bf16.mxu0 %v330
    %394 = vmatpush1.bf16.msra.mxu0 %v329
    %395 = vmatprep.subr.bf16.mxu0 %v332
    %396 = vmatpush1.bf16.msra.mxu0 %v331
    %397 = vmatprep.subr.bf16.mxu0 %v334
    %398 = vmatpush1.bf16.msra.mxu0 %v333
    %399 = vmatprep.mubr.bf16.mxu0 %v162
    %400 = vmatmul.mubr.bf16.gmra.mrb[0].mxu0 %v161
    %v401 = vpop.f32.mrb[0].mxu0
    %v402 = vadd.f32 %v200, %v401
    %v403 = vpop.f32.mrb[0].mxu0
    %v404 = vadd.f32 %v204, %v403
    %v405 = vpop.f32.mrb[0].mxu0
    %v406 = vadd.f32 %v200, %v405
    %v407 = vpop.f32.mrb[0].mxu0
    %v408 = vadd.f32 %v204, %v407
    %409 = vdwg.mxu0
    %vm410 = vcmp.gt.f32.partialorder %v402, 0.0
    %vm411 = vcmp.gt.f32.partialorder %v404, 0.0
    %vm412 = vcmp.gt.f32.partialorder %v406, 0.0
    %vm413 = vcmp.gt.f32.partialorder %v408, 0.0
    %v414 = vmul.f32 %v402, 0.2
    %v415 = vmul.f32 %v404, 0.2
    %v416 = vmul.f32 %v406, 0.2
    %v417 = vmul.f32 %v408, 0.2
    %v418 = vsel %vm410, %v402, %v414
    %v419 = vsel %vm411, %v404, %v415
    %v420 = vsel %vm412, %v406, %v416
    %v421 = vsel %vm413, %v408, %v417
    %v422 = vld [vmem:[%s5] sm:$0x3]
    %v423 = vpack.c.bf16 %v420, %v418
    %v424 = vpack.c.bf16 %v421, %v419
    %v425 = vld [vmem:[#allocation2] sm:$0x1]
    %427 = vset.pattern.permute.xlu0 0
    %428 = vperm.xlu0 %427, %v425
    %v429 = vpop.permute.xlu0 %428
    %v431 = vlaneseq
    %v432 = vshrl.u32 %v431, 7
    %v433 = vsub.s32 0, %v432
    %v434 = vrot.slane %v429, %v433
    %v437 = vunpack.c.l.s4 1966171168
    %v438 = vunpack.c.0.s8 %v437
    %v439 = vlaneseq
    %v440 = vshrl.u32 %v439, 7
    %v441 = vsub.s32 %v438, %v440
    %v442 = vrot.slane %v422, %v441
    %v443 = vcombine.high %v442, %v442
    %v445 = vunpack.c.l.s4 1966171168
    %v446 = vunpack.c.0.s8 %v445
    %v447 = vlaneseq
    %v448 = vshrl.u32 %v447, 7
    %v449 = vsub.s32 %v446, %v448
    %v450 = vrot.slane %v442, %v449
    %v452 = vunpack.c.l.s4 1966171168
    %v453 = vunpack.c.0.s8 %v452
    %v454 = vlaneseq
    %v455 = vshrl.u32 %v454, 7
    %v456 = vsub.s32 %v453, %v455
    %v457 = vrot.slane %v443, %v456
    %460 = vmatprep.subr.bf16.mxu0 %v424
    %461 = vmatpush1.bf16.xpose.msra.mxu0 %v423
    %462 = vmatprep.subr.bf16.mxu0 0
    %463 = vmatpush1.bf16.xpose.msra.mxu0 0
    %464 = vmatprep.subr.bf16.mxu0 0
    %465 = vmatpush1.bf16.xpose.msra.mxu0 0
    %466 = vmatprep.subr.bf16.mxu0 0
    %467 = vmatpush1.bf16.xpose.msra.mxu0 0
    %468 = vmatprep.subr.bf16.mxu0 0
    %469 = vmatpush1.bf16.xpose.msra.mxu0 0
    %470 = vmatprep.subr.bf16.mxu0 0
    %471 = vmatpush1.bf16.xpose.msra.mxu0 0
    %472 = vmatprep.subr.bf16.mxu0 0
    %473 = vmatpush1.bf16.xpose.msra.mxu0 0
    %474 = vmatprep.subr.bf16.mxu0 0
    %475 = vmatpush1.bf16.xpose.msra.mxu0 0
    %476 = vmatprep.subr.bf16.mxu0 0
    %477 = vmatpush1.bf16.xpose.msra.mxu0 0
    %478 = vmatprep.subr.bf16.mxu0 0
    %479 = vmatpush1.bf16.xpose.msra.mxu0 0
    %480 = vmatprep.subr.bf16.mxu0 0
    %481 = vmatpush1.bf16.xpose.msra.mxu0 0
    %482 = vmatprep.subr.bf16.mxu0 0
    %483 = vmatpush1.bf16.xpose.msra.mxu0 0
    %484 = vmatprep.subr.bf16.mxu0 0
    %485 = vmatpush1.bf16.xpose.msra.mxu0 0
    %486 = vmatprep.subr.bf16.mxu0 0
    %487 = vmatpush1.bf16.xpose.msra.mxu0 0
    %488 = vmatprep.subr.bf16.mxu0 0
    %489 = vmatpush1.bf16.xpose.msra.mxu0 0
    %490 = vmatprep.subr.bf16.mxu0 0
    %491 = vmatpush1.bf16.xpose.msra.mxu0 0
    %492 = vmatprep.mubr.bf16.mxu0 %v457
    %493 = vmatmul.mubr.bf16.gmra.mrb[0].mxu0 %v450
    %v494 = vpop.f32.mrb[0].mxu0
    %v495 = vadd.f32 %v434, %v494
    %v496 = vpop.f32.mrb[0].mxu0
    %v497 = vpop.f32.mrb[0].mxu0
    %v498 = vpop.f32.mrb[0].mxu0
    %499 = vdwg.mxu0
    %vm500 = vcmask 122880
    %501 = vst.msk [vmem:[#allocation9] sm:$0x1] %vm500, %v495
    // Predicated region
    $region42: #{tpu_custom_call.1} parent=1 // pred_check
      _
    $region43: #{tpu_custom_call.1} parent=1 // pred_check_branch
      %503 = sbr.rel (0) target = $region45
    $region44: #{tpu_custom_call.1} parent=1 // pred_region
      %s505 = ssub.s32 16, 16
      %506 = vsyncadd [#allocation5], %s505
      %s508 = sshll.u32 [#allocation9], 4
      %s509 = int_to_ptr.vmem [resolvable:$true] %s508
      %511 = dma.vmem_to_hbm [thread:$0]  %s509, 16, %s7, [#allocation5]
    $region45: #{tpu_custom_call.1} parent=1 // pred_fallthru
      _
    // Predicated region
    $region46: #{tpu_custom_call.1} parent=1 // pred_check
      _
    $region47: #{tpu_custom_call.1} parent=1 // pred_check_branch
      %513 = sbr.rel (0) target = $region49
    $region48: #{tpu_custom_call.1} parent=1 // pred_region
      %514 = dma.done [#allocation5], 16
    $region49: #{tpu_custom_call.1} parent=1 // pred_fallthru
      _
    %515 = vsyncpa [#allocation4], 1
    %516 = vsyncpa [#allocation7], 1
    %517 = vsyncpa [#allocation5], 1

</llo_original>
